<compile_context>
chip_gen: v7x
topology: tpu7x:2x2x1
jax: 0.10.0
libtpu: 0.0.40
codegen_flags: <defaults>
</compile_context>

<pallas_src>
import functools

import jax
import jax.numpy as jnp
from jax.experimental import pallas as pl
from jax.experimental.pallas import tpu as pltpu


def _inv_pixel_shuffle_kernel(x_ref, s_ref, o_ref, *, ratio, tc, compute_dtype):
    # x_ref: (TC, H, W) input channels
    # s_ref: (W, r*Wo) one-hot column selector (resident, constant index_map)
    # o_ref: (TC, r*r, Ho, Wo) output channels
    r = ratio
    H, W = x_ref.shape[1], x_ref.shape[2]
    Ho, Wo = H // r, W // r

    s = s_ref[...]  # fetched once per kernel launch, not rebuilt per step

    for ry in range(r):  # r is tiny (2..4): static unroll
        # Sublane-strided row subsample: rows ry, ry+r, ...  -> (TC, Ho, W).
        xr = x_ref[:, pl.ds(ry, Ho, stride=r), :].astype(compute_dtype)
        # One lane-dense MXU matmul selects every rx column phase at once:
        #   res[tc*Ho + ho, rx*Wo + wo] = x[tc, ho*r + ry, wo*r + rx]
        res = jnp.dot(xr.reshape(tc * Ho, W), s,
                      preferred_element_type=jnp.float32)       # (TC*Ho, r*Wo)
        for rx in range(r):
            slab = res[:, rx * Wo:(rx + 1) * Wo]                # (TC*Ho, Wo)
            o_ref[:, ry * r + rx, :, :] = (
                slab.reshape(tc, Ho, Wo).astype(o_ref.dtype))


def _make_col_selector(W, ratio, dtype):
    """S[w, rx*Wo + wo] = 1  iff  w == wo*ratio + rx  (selects columns rx::ratio)."""
    Wo = W // ratio
    w_idx = jnp.arange(W, dtype=jnp.int32)[:, None]              # (W, 1)
    col = jnp.arange(ratio * Wo, dtype=jnp.int32)[None, :]       # (1, r*Wo)
    rx = col // Wo
    wo = col % Wo
    return (w_idx == wo * ratio + rx).astype(dtype)


def _choose_tc(bc, h, w, itemsize):
    """Channels per grid step + generation flag, sized for VMEM per TPU gen."""
    kind = ""
    try:
        kind = jax.devices()[0].device_kind.lower()
    except Exception:
        pass
    is_v7 = ("v7" in kind) or ("7x" in kind)
    # Input-block byte target.  v7x has 64 MiB physical VMEM (vs 128 MiB on
    # v5e/v6e) so it gets ~half the tile.  MiB-scale blocks already sit near
    # the HBM roofline for this memory-bound relayout.
    target_block_bytes = (4 if is_v7 else 8) * 1024 * 1024
    max_tc = max(1, target_block_bytes // (h * w * itemsize))
    if bc >= 2:
        # Keep >= 2 grid steps so both v7x TensorCores get work.
        max_tc = min(max_tc, bc // 2)
    max_tc = min(max_tc, bc)
    # Largest divisor of bc that does not exceed max_tc (grid must tile BC).
    tc = 1
    d = 1
    while d * d <= bc:
        if bc % d == 0:
            if d <= max_tc:
                tc = max(tc, d)
            q = bc // d
            if q <= max_tc:
                tc = max(tc, q)
        d += 1
    return tc, is_v7


def inv_pixel_shuffle_ref(x, ratio=2):
    """Pure-JAX reference, mirroring the PyTorch view/permute/view."""
    B, C, H, W = x.shape
    y = x.reshape(B, C, H // ratio, ratio, W // ratio, ratio)
    y = jnp.transpose(y, (0, 1, 3, 5, 2, 4))
    return y.reshape(B, -1, H // ratio, W // ratio)


def inv_pixel_shuffle(x, ratio=2):
    """Pallas equivalent of invPixelShuffle.forward for NCHW input."""
    B, C, H, W = x.shape
    r = ratio
    assert H % r == 0 and W % r == 0, (W, H, r)
    if r == 1:
        return x
    Ho, Wo = H // r, W // r

    if not jnp.issubdtype(x.dtype, jnp.floating):
        # TODO(synk): integer/bool dtypes use the XLA relayout path (f32 MXU
        # selection is inexact past 2^24 and v7x has no integer MXU mode).
        return inv_pixel_shuffle_ref(x, ratio=r)

    BC = B * C
    compute_dtype = jnp.bfloat16 if x.dtype == jnp.bfloat16 else jnp.float32
    tc, is_v7 = _choose_tc(BC, H, W, x.dtype.itemsize)

    xf = x.reshape(BC, H, W)                       # metadata-only reshape
    sel = _make_col_selector(W, r, compute_dtype)  # built once, outside kernel

    kernel = functools.partial(
        _inv_pixel_shuffle_kernel, ratio=r, tc=tc, compute_dtype=compute_dtype)

    out = pl.pallas_call(
        kernel,
        out_shape=jax.ShapeDtypeStruct((BC, r * r, Ho, Wo), x.dtype),
        grid_spec=pltpu.PrefetchScalarGridSpec(
            num_scalar_prefetch=0,
            grid=(BC // tc,),
            in_specs=[
                pl.BlockSpec((tc, H, W), lambda i: (i, 0, 0)),
                # Constant index_map -> selector DMA'd once, stays resident.
                pl.BlockSpec((W, r * Wo), lambda i: (0, 0)),
            ],
            out_specs=pl.BlockSpec((tc, r * r, Ho, Wo),
                                   lambda i: (i, 0, 0, 0)),
        ),
        compiler_params=pltpu.CompilerParams(
            dimension_semantics=("parallel",),
            vmem_limit_bytes=(32 if is_v7 else 64) * 1024 * 1024,
        ),
    )(xf, sel)

    # channel order: c_out = c*r*r + ry*r + rx  (matches PyTorch permute/view);
    # metadata-only reshape.
    return out.reshape(B, C * r * r, Ho, Wo)


if __name__ == "__main__":
    key = jax.random.PRNGKey(0)
    x = jax.random.normal(key, (2, 4, 16, 16), dtype=jnp.float32)

    out = inv_pixel_shuffle(x, ratio=2)
    out = jax.block_until_ready(out)

    ref = inv_pixel_shuffle_ref(x, ratio=2)
    assert out.shape == (2, 16, 8, 8), out.shape
    assert jnp.allclose(out, ref, atol=1e-6, rtol=0), "kernel/reference mismatch"
    print("KERNEL_OK")
</pallas_src>

<mosaic_0001>
module attributes {stable_mosaic.version = 11 : i64} {
  func.func @_inv_pixel_shuffle_kernel(%arg0: i32, %arg1: memref<4x16x16xf32, #tpu.memory_space<vmem>>, %arg2: memref<16x16xf32, #tpu.memory_space<vmem>>, %arg3: memref<4x4x8x8xf32, #tpu.memory_space<vmem>>) attributes {dimension_semantics = [#tpu.dimension_semantics<parallel>], iteration_bounds = array<i64: 2>, scalar_prefetch = 0 : i64, scratch_operands = 0 : i64, tpu.core_type = #tpu.core_type<tc>, window_params = [{transform_indices = @transform_0, window_bounds = array<i64: 4, 16, 16>}, {pipeline_mode = #tpu.pipeline_mode<synchronous>, transform_indices = @transform_1, window_bounds = array<i64: 16, 16>}, {transform_indices = @transform_2, window_bounds = array<i64: 4, 4, 8, 8>}]} {
    %c0 = arith.constant 0 : index
    %c0_0 = arith.constant 0 : index
    %0 = vector.load %arg2[%c0, %c0_0] : memref<16x16xf32, #tpu.memory_space<vmem>>, vector<16x16xf32>
    %c0_1 = arith.constant 0 : index
    %c0_2 = arith.constant 0 : index
    %c0_3 = arith.constant 0 : index
    %1 = tpu.strided_load %arg1[%c0_1, %c0_2, %c0_3] {strides = array<i32: 1, 2, 1>} : memref<4x16x16xf32, #tpu.memory_space<vmem>>, vector<4x8x16xf32>
    %2 = vector.shape_cast %1 : vector<4x8x16xf32> to vector<32x16xf32>
    %cst = arith.constant dense<0.000000e+00> : vector<32x16xf32>
    %3 = tpu.matmul %2, %0, %cst {dimension_numbers = #tpu.dot_dimension_numbers<[1], [0], [0], [1], [0, 0, 1, 1], [], []>} : vector<32x16xf32>, vector<16x16xf32>, vector<32x16xf32> -> vector<32x16xf32>
    %4 = vector.extract_strided_slice %3 {offsets = [0, 0], sizes = [32, 8], strides = [1, 1]} : vector<32x16xf32> to vector<32x8xf32>
    %5 = vector.shape_cast %4 : vector<32x8xf32> to vector<4x8x8xf32>
    %c0_4 = arith.constant 0 : index
    %c0_5 = arith.constant 0 : index
    %c0_6 = arith.constant 0 : index
    %c0_7 = arith.constant 0 : index
    %6 = vector.load %arg3[%c0_4, %c0_5, %c0_6, %c0_7] : memref<4x4x8x8xf32, #tpu.memory_space<vmem>>, vector<4x1x8x8xf32>
    %7 = vector.shape_cast %6 : vector<4x1x8x8xf32> to vector<4x8x8xf32>
    %8 = vector.shape_cast %5 : vector<4x8x8xf32> to vector<4x1x8x8xf32>
    tpu.vector_store %arg3[%c0_4, %c0_5, %c0_6, %c0_7], %8 {strides = array<i32>} : memref<4x4x8x8xf32, #tpu.memory_space<vmem>>, vector<4x1x8x8xf32>,
    %9 = vector.extract_strided_slice %3 {offsets = [0, 8], sizes = [32, 8], strides = [1, 1]} : vector<32x16xf32> to vector<32x8xf32>
    %10 = vector.shape_cast %9 : vector<32x8xf32> to vector<4x8x8xf32>
    %c0_8 = arith.constant 0 : index
    %c1 = arith.constant 1 : index
    %c0_9 = arith.constant 0 : index
    %c0_10 = arith.constant 0 : index
    %11 = vector.load %arg3[%c0_8, %c1, %c0_9, %c0_10] : memref<4x4x8x8xf32, #tpu.memory_space<vmem>>, vector<4x1x8x8xf32>
    %12 = vector.shape_cast %11 : vector<4x1x8x8xf32> to vector<4x8x8xf32>
    %13 = vector.shape_cast %10 : vector<4x8x8xf32> to vector<4x1x8x8xf32>
    tpu.vector_store %arg3[%c0_8, %c1, %c0_9, %c0_10], %13 {strides = array<i32>} : memref<4x4x8x8xf32, #tpu.memory_space<vmem>>, vector<4x1x8x8xf32>,
    %c0_11 = arith.constant 0 : index
    %c1_12 = arith.constant 1 : index
    %c0_13 = arith.constant 0 : index
    %14 = tpu.strided_load %arg1[%c0_11, %c1_12, %c0_13] {strides = array<i32: 1, 2, 1>} : memref<4x16x16xf32, #tpu.memory_space<vmem>>, vector<4x8x16xf32>
    %15 = vector.shape_cast %14 : vector<4x8x16xf32> to vector<32x16xf32>
    %cst_14 = arith.constant dense<0.000000e+00> : vector<32x16xf32>
    %16 = tpu.matmul %15, %0, %cst_14 {dimension_numbers = #tpu.dot_dimension_numbers<[1], [0], [0], [1], [0, 0, 1, 1], [], []>} : vector<32x16xf32>, vector<16x16xf32>, vector<32x16xf32> -> vector<32x16xf32>
    %17 = vector.extract_strided_slice %16 {offsets = [0, 0], sizes = [32, 8], strides = [1, 1]} : vector<32x16xf32> to vector<32x8xf32>
    %18 = vector.shape_cast %17 : vector<32x8xf32> to vector<4x8x8xf32>
    %c0_15 = arith.constant 0 : index
    %c2 = arith.constant 2 : index
    %c0_16 = arith.constant 0 : index
    %c0_17 = arith.constant 0 : index
    %19 = vector.load %arg3[%c0_15, %c2, %c0_16, %c0_17] : memref<4x4x8x8xf32, #tpu.memory_space<vmem>>, vector<4x1x8x8xf32>
    %20 = vector.shape_cast %19 : vector<4x1x8x8xf32> to vector<4x8x8xf32>
    %21 = vector.shape_cast %18 : vector<4x8x8xf32> to vector<4x1x8x8xf32>
    tpu.vector_store %arg3[%c0_15, %c2, %c0_16, %c0_17], %21 {strides = array<i32>} : memref<4x4x8x8xf32, #tpu.memory_space<vmem>>, vector<4x1x8x8xf32>,
    %22 = vector.extract_strided_slice %16 {offsets = [0, 8], sizes = [32, 8], strides = [1, 1]} : vector<32x16xf32> to vector<32x8xf32>
    %23 = vector.shape_cast %22 : vector<32x8xf32> to vector<4x8x8xf32>
    %c0_18 = arith.constant 0 : index
    %c3 = arith.constant 3 : index
    %c0_19 = arith.constant 0 : index
    %c0_20 = arith.constant 0 : index
    %24 = vector.load %arg3[%c0_18, %c3, %c0_19, %c0_20] : memref<4x4x8x8xf32, #tpu.memory_space<vmem>>, vector<4x1x8x8xf32>
    %25 = vector.shape_cast %24 : vector<4x1x8x8xf32> to vector<4x8x8xf32>
    %26 = vector.shape_cast %23 : vector<4x8x8xf32> to vector<4x1x8x8xf32>
    tpu.vector_store %arg3[%c0_18, %c3, %c0_19, %c0_20], %26 {strides = array<i32>} : memref<4x4x8x8xf32, #tpu.memory_space<vmem>>, vector<4x1x8x8xf32>,
    return
  }
  func.func @transform_0(%arg0: i32) -> (i32, i32, i32) {
    %c0_i32 = arith.constant 0 : i32
    %c0_i32_0 = arith.constant 0 : i32
    %c0_i32_1 = arith.constant 0 : i32
    return %arg0, %c0_i32, %c0_i32_0 : i32, i32, i32
  }
  func.func @transform_1(%arg0: i32) -> (i32, i32) {
    %c0_i32 = arith.constant 0 : i32
    %c0_i32_0 = arith.constant 0 : i32
    %c0_i32_1 = arith.constant 0 : i32
    return %c0_i32, %c0_i32_0 : i32, i32
  }
  func.func @transform_2(%arg0: i32) -> (i32, i32, i32, i32) {
    %c0_i32 = arith.constant 0 : i32
    %c0_i32_0 = arith.constant 0 : i32
    %c0_i32_1 = arith.constant 0 : i32
    %c0_i32_2 = arith.constant 0 : i32
    return %arg0, %c0_i32, %c0_i32_0, %c0_i32_1 : i32, i32, i32, i32
  }
}

</mosaic_0001>

<llo_original>
// kernel: tpu_custom_call.1
$region0: #{tpu_custom_call.1}
  #allocation0 [shape = 'u32[]', space=smem, size = 0x4, offset = 0x4, fixed_abs, tag = 'smem constant byte address 0x4 - core index']
  #allocation1 [shape = 'u32[144,128]{1,0:T(1,128)}', space=vmem, size = 0x12000, scoped, tag = 'internal scratch']
  %s0 = inlined_call_operand.hbm [shape: f32[8,16,16], index: 0, kind: input, shape index: {}]
  %s1 = inlined_call_operand.hbm [shape: f32[16,16], index: 1, kind: input, shape index: {}]
  %s2 = inlined_call_operand.hbm [shape: f32[8,4,8,8], index: 2, kind: output, shape index: {}]
  %s3 = sld [smem:[#allocation0]]
  $region49: #{tpu_custom_call.1} parent=0
    _
  %s5 = ssub.s32 1, %s3
  %s6 = scalar_select 0, %s5, %s3
  $region1: #{tpu_custom_call.1} parent=0
    #allocation2 [shape = 'u8[65536]{0}', space=vmem, size = 0x10000, scoped, tag = 'input window, operand 0']
    #allocation3 [shape = 's32[2]{0}', space=sflag, size = 0x8, scoped, tag = 'scoped memory for tpu_custom_call.1']
    #allocation4 [shape = 's32[2]{0}', space=sflag, size = 0x8, scoped, tag = 'scoped memory for tpu_custom_call.1']
    #allocation5 [shape = 'u8[8192]{0}', space=vmem, size = 0x2000, scoped, tag = 'input window, operand 1, single buffered']
    #allocation6 [shape = 's32[1]{0}', space=sflag, size = 0x4, scoped, tag = 'scoped memory for tpu_custom_call.1']
    #allocation7 [shape = 'u8[131072]{0}', space=vmem, size = 0x20000, scoped, tag = 'output window, operand 0']
    %7 = vsyncpa [#allocation3], 0
    %s8 = scalar_lea.sflag [#allocation3], 1
    %9 = vsyncpa %s8, 0
    %10 = vsyncpa [#allocation6], 0
    %11 = vsyncpa [#allocation4], 0
    %s12 = scalar_lea.sflag [#allocation4], 1
    %13 = vsyncpa %s12, 0
    loop: start=0, step=1, limit=4
    $region2: #{tpu_custom_call.1} parent=1 // loop_pre_header
      _
    $region3: #{tpu_custom_call.1} parent=1 // loop_header
      %s15 = sphi 0, %s19
      %p16 = scmp.ge.s32.totalorder %s15, 4
      %s25 = sphi 0, %s27
      %s28 = sphi 0, %s25
      %s29 = sphi 0, %s28
      %s45 = sphi 0, %s29
      %s49 = sphi 0, %s49
      %s51 = sphi 0, %s49
      %s52 = sphi 0, %s51
      %s66 = sphi 0, %s52
      %s72 = sphi 0, %s74
      %s75 = sphi 0, %s72
      %s76 = sphi 0, %s75
      %s92 = sphi 0, %s76
    $region4: #{tpu_custom_call.1} parent=1 // loop_header_branch
      %18 = sbr.rel (%p16) target = $region8
    $region5: #{tpu_custom_call.1} parent=1 // loop_body
      %s20 = ssub.s32 %s15, 1
      %s21 = ssub.s32 %s15, 2
      %s22 = sadd.s32 %s15, 1
      %s23 = ssub.s32 %s15, %s22
      %p24 = scmp.eq.s32.totalorder %s23, 0
      %s26 = sadd.s32 %s25, 1
      %s27 = scalar_select %p24, %s25, %s26
      %p30 = pneg %p24
      %p31 = scmp.eq.s32.totalorder %s15, 1
      %p32 = por %p30, %p31
      %p33 = scmp.ne.s32.totalorder %s25, %s28
      %p34 = scmp.eq.s32.totalorder %s15, 0
      %p35 = por %p33, %p34
      %p36 = scmp.ne.s32.totalorder %s25, %s28
      %p37 = scmp.eq.s32.totalorder %s20, 1
      %p38 = por %p36, %p37
      %p39 = scmp.ne.s32.totalorder %s28, %s29
      %p40 = scmp.eq.s32.totalorder %s20, 0
      %p41 = por %p39, %p40
      %p42 = scmp.ne.s32.totalorder %s28, %s29
      %p43 = scmp.eq.s32.totalorder %s21, 1
      %p44 = por %p42, %p43
      %p46 = scmp.ne.s32.totalorder %s29, %s45
      %p47 = scmp.eq.s32.totalorder %s21, 0
      %p48 = por %p46, %p47
      %s50 = sadd.s32 %s49, 1
      %p53 = scmp.eq.s32.totalorder %s15, 1
      %p54 = scmp.ne.s32.totalorder %s49, %s51
      %p55 = scmp.eq.s32.totalorder %s15, 0
      %p56 = por %p54, %p55
      %p57 = scmp.ne.s32.totalorder %s49, %s51
      %p58 = scmp.eq.s32.totalorder %s20, 1
      %p59 = por %p57, %p58
      %p60 = scmp.ne.s32.totalorder %s51, %s52
      %p61 = scmp.eq.s32.totalorder %s20, 0
      %p62 = por %p60, %p61
      %p63 = scmp.ne.s32.totalorder %s51, %s52
      %p64 = scmp.eq.s32.totalorder %s21, 1
      %p65 = por %p63, %p64
      %p67 = scmp.ne.s32.totalorder %s52, %s66
      %p68 = scmp.eq.s32.totalorder %s21, 0
      %p69 = por %p67, %p68
      %s70 = ssub.s32 %s15, %s22
      %p71 = scmp.eq.s32.totalorder %s70, 0
      %s73 = sadd.s32 %s72, 1
      %s74 = scalar_select %p71, %s72, %s73
      %p77 = pneg %p71
      %p78 = scmp.eq.s32.totalorder %s15, 1
      %p79 = por %p77, %p78
      %p80 = scmp.ne.s32.totalorder %s72, %s75
      %p81 = scmp.eq.s32.totalorder %s15, 0
      %p82 = por %p80, %p81
      %p83 = scmp.ne.s32.totalorder %s72, %s75
      %p84 = scmp.eq.s32.totalorder %s20, 1
      %p85 = por %p83, %p84
      %p86 = scmp.ne.s32.totalorder %s75, %s76
      %p87 = scmp.eq.s32.totalorder %s20, 0
      %p88 = por %p86, %p87
      %p89 = scmp.ne.s32.totalorder %s75, %s76
      %p90 = scmp.eq.s32.totalorder %s21, 1
      %p91 = por %p89, %p90
      %p93 = scmp.ne.s32.totalorder %s76, %s92
      %p94 = scmp.eq.s32.totalorder %s21, 0
      %p95 = por %p93, %p94
      %p96 = scmp.le.s32.totalorder 1, %s15
      %p97 = scmp.lt.s32.totalorder %s15, 3
      %p98 = pnand %p96, %p97
      %p99 = pneg %p98
      // Predicated region
      $region9: #{tpu_custom_call.1} parent=5 // pred_check
        _
      $region10: #{tpu_custom_call.1} parent=5 // pred_check_branch
        %101 = sbr.rel (%p98) target = $region12
      $region11: #{tpu_custom_call.1} parent=5 // pred_region
        %s102 = ssub.s32 %s15, 1
        // Predicated region
        $region13: #{tpu_custom_call.1} parent=11 // pred_check
          %p103 = pneg %p62
        $region14: #{tpu_custom_call.1} parent=11 // pred_check_branch
          %105 = sbr.rel (%p103) target = $region16
        $region15: #{tpu_custom_call.1} parent=11 // pred_region
          %s107 = ssub.s32 256, 256
          %108 = vsyncadd [#allocation6], %s107
          %s109 = sshll.u32 [#allocation5], 4
          %s110 = int_to_ptr.vmem [resolvable:$true] %s109
          %115 = dma.hbm_to_vmem [thread:$0]  %s1, 256, %s110, [#allocation6], 128, 128, 8
        $region16: #{tpu_custom_call.1} parent=11 // pred_fallthru
          _
      $region12: #{tpu_custom_call.1} parent=5 // pred_fallthru
        _
      %p116 = scmp.lt.s32.totalorder %s15, 2
      // Predicated region
      $region17: #{tpu_custom_call.1} parent=5 // pred_check
        %p117 = pneg %p116
      $region18: #{tpu_custom_call.1} parent=5 // pred_check_branch
        %119 = sbr.rel (%p117) target = $region20
      $region19: #{tpu_custom_call.1} parent=5 // pred_region
        // Predicated region
        $region21: #{tpu_custom_call.1} parent=19 // pred_check
          %p120 = pneg %p35
        $region22: #{tpu_custom_call.1} parent=19 // pred_check_branch
          %122 = sbr.rel (%p120) target = $region24
        $region23: #{tpu_custom_call.1} parent=19 // pred_region
          %s123 = sand.u32 %s25, 1
          %s124 = scalar_lea.sflag [#allocation3], %s123
          %s125 = sand.u32 %s25, 1
          %s126 = smul.addr %s125, 64
          %s127 = scalar_lea.vmem [#allocation2], %s126
          %s128 = smul.u32 4, %s15
          %s130 = ssub.s32 1024, 1024
          %131 = vsyncadd %s124, %s130
          %s132 = smul.addr %s128, 2
          %s133 = smul.addr %s132, 128
          %s134 = scalar_lea.hbm %s0, %s133
          %s135 = sshll.u32 %s127, 4
          %s136 = int_to_ptr.vmem [resolvable:$true] %s135
          %141 = dma.hbm_to_vmem [thread:$0]  %s134, 1024, %s136, %s124, 128, 128, 8
        $region24: #{tpu_custom_call.1} parent=19 // pred_fallthru
          _
      $region20: #{tpu_custom_call.1} parent=5 // pred_fallthru
        _
      %p142 = scmp.le.s32.totalorder 1, %s15
      %p143 = scmp.lt.s32.totalorder %s15, 3
      %p144 = pnand %p142, %p143
      %p145 = pneg %p144
      // Predicated region
      $region25: #{tpu_custom_call.1} parent=5 // pred_check
        _
      $region26: #{tpu_custom_call.1} parent=5 // pred_check_branch
        %147 = sbr.rel (%p144) target = $region28
      $region27: #{tpu_custom_call.1} parent=5 // pred_region
        %s148 = ssub.s32 %s15, 1
        %s149 = sand.u32 %s28, 1
        %s150 = scalar_lea.sflag [#allocation3], %s149
        %s151 = sand.u32 %s28, 1
        %s152 = smul.addr %s151, 64
        %s153 = scalar_lea.vmem [#allocation2], %s152
        // Predicated region
        $region29: #{tpu_custom_call.1} parent=27 // pred_check
          %p154 = pneg %p41
        $region30: #{tpu_custom_call.1} parent=27 // pred_check_branch
          %156 = sbr.rel (%p154) target = $region32
        $region31: #{tpu_custom_call.1} parent=27 // pred_region
          %157 = dma.done %s150, 1024
        $region32: #{tpu_custom_call.1} parent=27 // pred_fallthru
          _
        // Predicated region
        $region33: #{tpu_custom_call.1} parent=27 // pred_check
          %p158 = pneg %p62
        $region34: #{tpu_custom_call.1} parent=27 // pred_check_branch
          %160 = sbr.rel (%p158) target = $region36
        $region35: #{tpu_custom_call.1} parent=27 // pred_region
          %161 = dma.done [#allocation6], 256
        $region36: #{tpu_custom_call.1} parent=27 // pred_fallthru
          _
        %s162 = sand.u32 %s28, 1
        %s163 = scalar_lea.sflag [#allocation3], %s162
        %s164 = sand.u32 %s28, 1
        %s165 = smul.addr %s164, 64
        %s166 = scalar_lea.vmem [#allocation2], %s165
        %p167 = pneg %p41
        %p168 = pneg %p38
        %p169 = pneg %p62
        %p170 = pneg %p59
        %p171 = pneg %p88
        %p172 = pneg %p85
        %s173 = sand.u32 %s75, 1
        %s174 = scalar_lea.sflag [#allocation4], %s173
        %s175 = sand.u32 %s75, 1
        %s176 = smul.addr %s175, 128
        %s177 = scalar_lea.vmem [#allocation7], %s176
        %s178 = smul.u32 4, %s20
        %s179 = smul.u32 4, %s20
        %v180 = vld [vmem:[#allocation5] sm:$0xff]
        %v181 = vld [vmem:[#allocation5 + $0x8] sm:$0xff]
        %v182 = vld [vmem:[%s153] ss:$2 sm:$0xff]
        %s183 = scalar_lea.vmem %s153, 16 [#allocation2]
        %v184 = vld [vmem:[%s183] ss:$2 sm:$0xff]
        %s185 = scalar_lea.vmem %s153, 32 [#allocation2]
        %v186 = vld [vmem:[%s185] ss:$2 sm:$0xff]
        %s187 = scalar_lea.vmem %s153, 48 [#allocation2]
        %v188 = vld [vmem:[%s187] ss:$2 sm:$0xff]
        %vm189 = vcmask 130048
        %v191 = vsel %vm189, %v182, 0
        %v194 = vsel %vm189, %v184, 0
        %v197 = vsel %vm189, %v186, 0
        %v200 = vsel %vm189, %v188, 0
        %202 = vmatprep.subr.mxu0 0.0
        %203 = vmatpush1.msra.mxu0 %v180
        %204 = vmatprep.subr.mxu0 0.0
        %205 = vmatpush1.msra.mxu0 %v181
        %206 = vmatprep.subr.mxu0 0.0
        %207 = vmatpush1.msra.mxu0 0.0
        %208 = vmatprep.subr.mxu0 0.0
        %209 = vmatpush1.msra.mxu0 0.0
        %210 = vmatprep.subr.mxu0 0.0
        %211 = vmatpush1.msra.mxu0 0.0
        %212 = vmatprep.subr.mxu0 0.0
        %213 = vmatpush1.msra.mxu0 0.0
        %214 = vmatprep.subr.mxu0 0.0
        %215 = vmatpush1.msra.mxu0 0.0
        %216 = vmatprep.subr.mxu0 0.0
        %217 = vmatpush1.msra.mxu0 0.0
        %218 = vmatprep.subr.mxu0 0.0
        %219 = vmatpush1.msra.mxu0 0.0
        %220 = vmatprep.subr.mxu0 0.0
        %221 = vmatpush1.msra.mxu0 0.0
        %222 = vmatprep.subr.mxu0 0.0
        %223 = vmatpush1.msra.mxu0 0.0
        %224 = vmatprep.subr.mxu0 0.0
        %225 = vmatpush1.msra.mxu0 0.0
        %226 = vmatprep.subr.mxu0 0.0
        %227 = vmatpush1.msra.mxu0 0.0
        %228 = vmatprep.subr.mxu0 0.0
        %229 = vmatpush1.msra.mxu0 0.0
        %230 = vmatprep.subr.mxu0 0.0
        %231 = vmatpush1.msra.mxu0 0.0
        %232 = vmatprep.subr.mxu0 0.0
        %233 = vmatpush1.msra.mxu0 0.0
        %234 = vmatprep.subr.mxu0 0.0
        %235 = vmatpush1.msra.mxu0 0.0
        %236 = vmatprep.subr.mxu0 0.0
        %237 = vmatpush1.msra.mxu0 0.0
        %238 = vmatprep.subr.mxu0 0.0
        %239 = vmatpush1.msra.mxu0 0.0
        %240 = vmatprep.subr.mxu0 0.0
        %241 = vmatpush1.msra.mxu0 0.0
        %242 = vmatprep.subr.mxu0 0.0
        %243 = vmatpush1.msra.mxu0 0.0
        %244 = vmatprep.subr.mxu0 0.0
        %245 = vmatpush1.msra.mxu0 0.0
        %246 = vmatprep.subr.mxu0 0.0
        %247 = vmatpush1.msra.mxu0 0.0
        %248 = vmatprep.subr.mxu0 0.0
        %249 = vmatpush1.msra.mxu0 0.0
        %250 = vmatprep.subr.mxu0 0.0
        %251 = vmatpush1.msra.mxu0 0.0
        %252 = vmatprep.subr.mxu0 0.0
        %253 = vmatpush1.msra.mxu0 0.0
        %254 = vmatprep.subr.mxu0 0.0
        %255 = vmatpush1.msra.mxu0 0.0
        %256 = vmatprep.subr.mxu0 0.0
        %257 = vmatpush1.msra.mxu0 0.0
        %258 = vmatprep.subr.mxu0 0.0
        %259 = vmatpush1.msra.mxu0 0.0
        %260 = vmatprep.subr.mxu0 0.0
        %261 = vmatpush1.msra.mxu0 0.0
        %262 = vmatprep.subr.mxu0 0.0
        %263 = vmatpush1.msra.mxu0 0.0
        %264 = vmatprep.subr.mxu0 0.0
        %265 = vmatpush1.msra.mxu0 0.0
        %266 = vmatprep.mubr.f32.mxu0 0.0
        %267 = vmatmul.mubr.f32.gmra.mrb[0].mxu0 %v191
        %v268 = vpop.f32.mrb[0].mxu0
        %v269 = vadd.f32 0.0, %v268
        %v270 = vpop.f32.mrb[0].mxu0
        %271 = vmatprep.mubr.f32.mxu0 0.0
        %272 = vmatmul.mubr.f32.gmra.mrb[0].mxu0 %v194
        %v273 = vpop.f32.mrb[0].mxu0
        %v274 = vadd.f32 0.0, %v273
        %v275 = vpop.f32.mrb[0].mxu0
        %276 = vmatprep.mubr.f32.mxu0 0.0
        %277 = vmatmul.mubr.f32.gmra.mrb[0].mxu0 %v197
        %v278 = vpop.f32.mrb[0].mxu0
        %v279 = vadd.f32 0.0, %v278
        %v280 = vpop.f32.mrb[0].mxu0
        %281 = vmatprep.mubr.f32.mxu0 0.0
        %282 = vmatmul.mubr.f32.gmra.mrb[0].mxu0 %v200
        %v283 = vpop.f32.mrb[0].mxu0
        %v284 = vadd.f32 0.0, %v283
        %v285 = vpop.f32.mrb[0].mxu0
        %286 = vdwg.mxu0
        %vm287 = vcmask 64512
        %288 = vst.msk [vmem:[%s177] sm:$0xff] %vm287, %v269
        %289 = vst.msk [vmem:[%s177 + $0x20] sm:$0xff] %vm287, %v274
        %290 = vst.msk [vmem:[%s177 + $0x40] sm:$0xff] %vm287, %v279
        %291 = vst.msk [vmem:[%s177 + $0x60] sm:$0xff] %vm287, %v284
        %296 = vrot.lane.b32.xlu0 %v269, 120
        %v297 = vpop.permute.xlu0 %296
        %298 = vrot.lane.b32.xlu0 %v274, 120
        %v299 = vpop.permute.xlu0 %298
        %300 = vrot.lane.b32.xlu0 %v279, 120
        %v301 = vpop.permute.xlu0 %300
        %302 = vrot.lane.b32.xlu0 %v284, 120
        %v303 = vpop.permute.xlu0 %302
        %s308 = scalar_lea.vmem %s177, 8 [#allocation7]
        %309 = vst.msk [vmem:[%s308] sm:$0xff] %vm287, %v297
        %310 = vst.msk [vmem:[%s308 + $0x20] sm:$0xff] %vm287, %v299
        %311 = vst.msk [vmem:[%s308 + $0x40] sm:$0xff] %vm287, %v301
        %312 = vst.msk [vmem:[%s308 + $0x60] sm:$0xff] %vm287, %v303
        %s313 = scalar_lea.vmem %s153, 1 [#allocation2]
        %v314 = vld [vmem:[%s313] ss:$2 sm:$0xff]
        %s315 = scalar_lea.vmem %s153, 17 [#allocation2]
        %v316 = vld [vmem:[%s315] ss:$2 sm:$0xff]
        %s317 = scalar_lea.vmem %s153, 33 [#allocation2]
        %v318 = vld [vmem:[%s317] ss:$2 sm:$0xff]
        %s319 = scalar_lea.vmem %s153, 49 [#allocation2]
        %v320 = vld [vmem:[%s319] ss:$2 sm:$0xff]
        %v322 = vsel %vm189, %v314, 0
        %v325 = vsel %vm189, %v316, 0
        %v328 = vsel %vm189, %v318, 0
        %v331 = vsel %vm189, %v320, 0
        %333 = vmatprep.subr.mxu0 0.0
        %334 = vmatpush1.msra.mxu0 %v180
        %335 = vmatprep.subr.mxu0 0.0
        %336 = vmatpush1.msra.mxu0 %v181
        %337 = vmatprep.subr.mxu0 0.0
        %338 = vmatpush1.msra.mxu0 0.0
        %339 = vmatprep.subr.mxu0 0.0
        %340 = vmatpush1.msra.mxu0 0.0
        %341 = vmatprep.subr.mxu0 0.0
        %342 = vmatpush1.msra.mxu0 0.0
        %343 = vmatprep.subr.mxu0 0.0
        %344 = vmatpush1.msra.mxu0 0.0
        %345 = vmatprep.subr.mxu0 0.0
        %346 = vmatpush1.msra.mxu0 0.0
        %347 = vmatprep.subr.mxu0 0.0
        %348 = vmatpush1.msra.mxu0 0.0
        %349 = vmatprep.subr.mxu0 0.0
        %350 = vmatpush1.msra.mxu0 0.0
        %351 = vmatprep.subr.mxu0 0.0
        %352 = vmatpush1.msra.mxu0 0.0
        %353 = vmatprep.subr.mxu0 0.0
        %354 = vmatpush1.msra.mxu0 0.0
        %355 = vmatprep.subr.mxu0 0.0
        %356 = vmatpush1.msra.mxu0 0.0
        %357 = vmatprep.subr.mxu0 0.0
        %358 = vmatpush1.msra.mxu0 0.0
        %359 = vmatprep.subr.mxu0 0.0
        %360 = vmatpush1.msra.mxu0 0.0
        %361 = vmatprep.subr.mxu0 0.0
        %362 = vmatpush1.msra.mxu0 0.0
        %363 = vmatprep.subr.mxu0 0.0
        %364 = vmatpush1.msra.mxu0 0.0
        %365 = vmatprep.subr.mxu0 0.0
        %366 = vmatpush1.msra.mxu0 0.0
        %367 = vmatprep.subr.mxu0 0.0
        %368 = vmatpush1.msra.mxu0 0.0
        %369 = vmatprep.subr.mxu0 0.0
        %370 = vmatpush1.msra.mxu0 0.0
        %371 = vmatprep.subr.mxu0 0.0
        %372 = vmatpush1.msra.mxu0 0.0
        %373 = vmatprep.subr.mxu0 0.0
        %374 = vmatpush1.msra.mxu0 0.0
        %375 = vmatprep.subr.mxu0 0.0
        %376 = vmatpush1.msra.mxu0 0.0
        %377 = vmatprep.subr.mxu0 0.0
        %378 = vmatpush1.msra.mxu0 0.0
        %379 = vmatprep.subr.mxu0 0.0
        %380 = vmatpush1.msra.mxu0 0.0
        %381 = vmatprep.subr.mxu0 0.0
        %382 = vmatpush1.msra.mxu0 0.0
        %383 = vmatprep.subr.mxu0 0.0
        %384 = vmatpush1.msra.mxu0 0.0
        %385 = vmatprep.subr.mxu0 0.0
        %386 = vmatpush1.msra.mxu0 0.0
        %387 = vmatprep.subr.mxu0 0.0
        %388 = vmatpush1.msra.mxu0 0.0
        %389 = vmatprep.subr.mxu0 0.0
        %390 = vmatpush1.msra.mxu0 0.0
        %391 = vmatprep.subr.mxu0 0.0
        %392 = vmatpush1.msra.mxu0 0.0
        %393 = vmatprep.subr.mxu0 0.0
        %394 = vmatpush1.msra.mxu0 0.0
        %395 = vmatprep.subr.mxu0 0.0
        %396 = vmatpush1.msra.mxu0 0.0
        %397 = vmatprep.mubr.f32.mxu0 0.0
        %398 = vmatmul.mubr.f32.gmra.mrb[0].mxu0 %v322
        %v399 = vpop.f32.mrb[0].mxu0
        %v400 = vadd.f32 0.0, %v399
        %v401 = vpop.f32.mrb[0].mxu0
        %402 = vmatprep.mubr.f32.mxu0 0.0
        %403 = vmatmul.mubr.f32.gmra.mrb[0].mxu0 %v325
        %v404 = vpop.f32.mrb[0].mxu0
        %v405 = vadd.f32 0.0, %v404
        %v406 = vpop.f32.mrb[0].mxu0
        %407 = vmatprep.mubr.f32.mxu0 0.0
        %408 = vmatmul.mubr.f32.gmra.mrb[0].mxu0 %v328
        %v409 = vpop.f32.mrb[0].mxu0
        %v410 = vadd.f32 0.0, %v409
        %v411 = vpop.f32.mrb[0].mxu0
        %412 = vmatprep.mubr.f32.mxu0 0.0
        %413 = vmatmul.mubr.f32.gmra.mrb[0].mxu0 %v331
        %v414 = vpop.f32.mrb[0].mxu0
        %v415 = vadd.f32 0.0, %v414
        %v416 = vpop.f32.mrb[0].mxu0
        %417 = vdwg.mxu0
        %s418 = scalar_lea.vmem %s177, 16 [#allocation7]
        %419 = vst.msk [vmem:[%s418] sm:$0xff] %vm287, %v400
        %420 = vst.msk [vmem:[%s418 + $0x20] sm:$0xff] %vm287, %v405
        %421 = vst.msk [vmem:[%s418 + $0x40] sm:$0xff] %vm287, %v410
        %422 = vst.msk [vmem:[%s418 + $0x60] sm:$0xff] %vm287, %v415
        %427 = vrot.lane.b32.xlu0 %v400, 120
        %v428 = vpop.permute.xlu0 %427
        %429 = vrot.lane.b32.xlu0 %v405, 120
        %v430 = vpop.permute.xlu0 %429
        %431 = vrot.lane.b32.xlu0 %v410, 120
        %v432 = vpop.permute.xlu0 %431
        %433 = vrot.lane.b32.xlu0 %v415, 120
        %v434 = vpop.permute.xlu0 %433
        %s439 = scalar_lea.vmem %s177, 24 [#allocation7]
        %440 = vst.msk [vmem:[%s439] sm:$0xff] %vm287, %v428
        %441 = vst.msk [vmem:[%s439 + $0x20] sm:$0xff] %vm287, %v430
        %442 = vst.msk [vmem:[%s439 + $0x40] sm:$0xff] %vm287, %v432
        %443 = vst.msk [vmem:[%s439 + $0x60] sm:$0xff] %vm287, %v434
        %s444 = sand.u32 %s75, 1
        %s445 = scalar_lea.sflag [#allocation4], %s444
        %s446 = sand.u32 %s75, 1
        %s447 = smul.addr %s446, 128
        %s448 = scalar_lea.vmem [#allocation7], %s447
        // Predicated region
        $region37: #{tpu_custom_call.1} parent=27 // pred_check
          %p449 = pneg %p85
        $region38: #{tpu_custom_call.1} parent=27 // pred_check_branch
          %451 = sbr.rel (%p449) target = $region40
        $region39: #{tpu_custom_call.1} parent=27 // pred_region
          %s452 = smul.u32 4, %s20
          %s454 = ssub.s32 2048, 2048
          %455 = vsyncadd %s445, %s454
          %s456 = smul.addr %s452, 4
          %s457 = smul.addr %s456, 128
          %s458 = scalar_lea.hbm %s2, %s457
          %s459 = sshll.u32 %s448, 4
          %s460 = int_to_ptr.vmem [resolvable:$true] %s459
          %465 = dma.vmem_to_hbm [thread:$0]  %s460, 2048, %s458, %s445, 128, 128, 8
        $region40: #{tpu_custom_call.1} parent=27 // pred_fallthru
          _
      $region28: #{tpu_custom_call.1} parent=5 // pred_fallthru
        _
      %p466 = scmp.le.s32.totalorder 2, %s15
      // Predicated region
      $region41: #{tpu_custom_call.1} parent=5 // pred_check
        %p467 = pneg %p466
      $region42: #{tpu_custom_call.1} parent=5 // pred_check_branch
        %469 = sbr.rel (%p467) target = $region44
      $region43: #{tpu_custom_call.1} parent=5 // pred_region
        %s470 = ssub.s32 %s15, 2
        // Predicated region
        $region45: #{tpu_custom_call.1} parent=43 // pred_check
          %p471 = pneg %p91
        $region46: #{tpu_custom_call.1} parent=43 // pred_check_branch
          %473 = sbr.rel (%p471) target = $region48
        $region47: #{tpu_custom_call.1} parent=43 // pred_region
          %s474 = sand.u32 %s76, 1
          %s475 = scalar_lea.sflag [#allocation4], %s474
          %s476 = sand.u32 %s76, 1
          %s477 = smul.addr %s476, 128
          %s478 = scalar_lea.vmem [#allocation7], %s477
          %479 = dma.done %s475, 2048
        $region48: #{tpu_custom_call.1} parent=43 // pred_fallthru
          _
      $region44: #{tpu_custom_call.1} parent=5 // pred_fallthru
        _
    $region6: #{tpu_custom_call.1} parent=1 // loop_footer
      %s19 = sadd.s32 1, %s15
    $region7: #{tpu_custom_call.1} parent=1 // loop_footer_branch
      %14 = sbr.rel target = $region3
    $region8: #{tpu_custom_call.1} parent=1 // loop_exit
      _
    %480 = vsyncpa [#allocation3], 1
    %s481 = scalar_lea.sflag [#allocation3], 1
    %482 = vsyncpa %s481, 1
    %483 = vsyncpa [#allocation6], 1
    %484 = vsyncpa [#allocation4], 1
    %s485 = scalar_lea.sflag [#allocation4], 1
    %486 = vsyncpa %s485, 1

</llo_original>
